<compile_context>
chip_gen: v6e
topology: v6e:2x2x1
jax: 0.10.0
libtpu: 0.0.40
codegen_flags: <defaults>
</compile_context>

<pallas_src>
import jax
import jax.numpy as jnp
from jax.experimental import pallas as pl
from jax.experimental.pallas import tpu as pltpu


def _nconv_matmul_kernel(x_ref, a_ref, o_ref):
    # x_ref: (TM, V)   a_ref: (V, W)   o_ref: (TM, W)
    # One MXU matmul per grid step; V (contraction) fits entirely, so no
    # K-loop / accumulator scratch is needed.  A is used untransposed.
    o_ref[...] = jnp.dot(
        x_ref[...], a_ref[...], preferred_element_type=jnp.float32
    ).astype(o_ref.dtype)


def _round_up(x, m):
    return (x + m - 1) // m * m


def _vmem_capacity_bytes():
    try:
        return int(pltpu.get_tpu_info().vmem_capacity_bytes)
    except Exception:
        return 128 << 20  # v5e / v6e default


def _device_kind():
    try:
        return jax.devices()[0].device_kind.lower()
    except Exception:
        return ""


def _is_two_tensorcore_chip(vmem_cap):
    # v7x: 2 TensorCores / chip, 64 MiB VMEM per TC.  v5e/v6e: 1 TC, 128 MiB.
    return ("v7" in _device_kind()) or (vmem_cap <= (64 << 20))


def _is_v5e():
    k = _device_kind()
    return ("v5e" in k) or ("v5 lite" in k) or ("v5litepod" in k)


def _choose_block_rows(m, v, w, in_itemsize, out_itemsize, x_buffers,
                       vmem_budget, *, target_bytes=16 << 20, row_cap=4096,
                       two_tc=False):
    """Rows per grid step: ~target_bytes of raw x+out traffic per step (so the
    ~0.35 us per-step overhead is noise), capped at row_cap, kept a multiple
    of 512 (clean 128/256-wide MXU passes, bf16 sublane packing), and shrunk
    until the padded, multi-buffered working set fits the VMEM budget."""

    def vmem_need(rows):
        vp, wp = _round_up(v, 128), _round_up(w, 128)
        return (rows * vp * in_itemsize * x_buffers        # x tiles
                + rows * wp * out_itemsize * 2             # out tiles
                + _round_up(v, 8) * wp * in_itemsize * 2)  # resident A

    align = 512 if m >= 512 else 8
    tm = target_bytes // max(1, v * in_itemsize + w * out_itemsize)
    tm = max(align, min(row_cap, (tm // align) * align))
    while tm > align and vmem_need(tm) > vmem_budget:
        tm -= align
    while tm > 8 and vmem_need(tm) > vmem_budget:   # very wide V/W fallback
        tm -= 8

    if m <= tm:
        return m, 1

    g = pl.cdiv(m, tm)
    if two_tc and g % 2:
        # 2-TC chips (v7x): prefer an even grid so the "parallel" axis splits
        # evenly across both TensorCores.  Parity is re-verified AFTER tm
        # rounding (the old version could silently lose it).
        for g_try in (g + 1, g + 3):
            tm_try = _round_up(pl.cdiv(m, g_try), align)
            g_new = pl.cdiv(m, tm_try)
            if g_new % 2 == 0 and vmem_need(tm_try) <= vmem_budget:
                return tm_try, g_new
    return tm, g


def nconv(x, A, *, compute_dtype=None, out_layout="ncwl", input_buffers=None):
    """Pallas TPU implementation of torch.einsum('ncvl,vw->ncwl', (x, A)).

    x: (N, C, V, L), A: (V, W)
      out_layout="ncwl" (default): returns (N, C, W, L)  (module semantics)
      out_layout="nclw":           returns (N, C, L, W)  (lets a consumer that
        can read L-major skip the final transpose / its HBM round trip)

    compute_dtype: cast x/A to this dtype (e.g. jnp.bfloat16) before the
      matmul; accumulation stays f32, output stays x.dtype.  The cast is fused
      with the input transpose so the transposed copy is written at half
      width.  None (default) keeps the exact f32 semantics of the module.
    input_buffers: pipeline depth for the x tiles (default: 3 on v5e where HBM
      is slowest and the per-step DMA may be exposed, else 2).
    """
    N, C, V, L = x.shape
    Va, W = A.shape
    assert Va == V, "A first dim must match x node dim"

    out_dtype = x.dtype
    in_dtype = jnp.dtype(compute_dtype) if compute_dtype is not None else jnp.dtype(x.dtype)
    in_itemsize = in_dtype.itemsize
    out_itemsize = jnp.dtype(out_dtype).itemsize

    # Fold (N, C, L) into one big M axis so the contraction over V becomes a
    # single lane-dense matmul (output lane dim = W, no masked stores).
    # The NCVL -> (M, V) transpose is fused by XLA with the dtype cast (one
    # read of x, half-width write when bf16) and is additionally marked
    # fusible into the pallas_call operand via allow_input_fusion.
    # TODO(synk): if the surrounding model can hand us x already as
    # (N, C, L, V), this transpose disappears entirely (review item #1).
    M = N * C * L
    xt = jnp.transpose(x, (0, 1, 3, 2)).reshape(M, V)
    a_in = A
    if in_dtype != x.dtype:
        xt = xt.astype(in_dtype)
    if in_dtype != A.dtype:
        a_in = A.astype(in_dtype)

    vmem_cap = _vmem_capacity_bytes()
    vmem_budget = max(8 << 20, vmem_cap - (16 << 20))  # physical minus headroom
    two_tc = _is_two_tensorcore_chip(vmem_cap)
    if input_buffers is None:
        input_buffers = 3 if _is_v5e() else 2

    tm, grid_m = _choose_block_rows(
        M, V, W, in_itemsize, out_itemsize, input_buffers, vmem_budget,
        two_tc=two_tc)

    # Explicit VMEM limit: working set (padded, multi-buffered) plus slack,
    # clamped below the chip's physical VMEM (64 MiB per TC on v7x).
    vp, wp = _round_up(V, 128), _round_up(W, 128)
    vmem_need = (tm * vp * in_itemsize * input_buffers
                 + tm * wp * out_itemsize * 2
                 + _round_up(V, 8) * wp * in_itemsize * 2)
    vmem_limit = int(min(max(2 * vmem_need, 8 << 20), vmem_budget))

    cost = pl.CostEstimate(
        flops=2 * M * V * W,
        transcendentals=0,
        bytes_accessed=(M * V + V * W) * in_itemsize + M * W * out_itemsize,
    )

    def _call(x_spec):
        return pl.pallas_call(
            _nconv_matmul_kernel,
            out_shape=jax.ShapeDtypeStruct((M, W), out_dtype),
            grid_spec=pl.GridSpec(
                grid=(grid_m,),
                in_specs=[
                    x_spec,                                  # x rows tile
                    pl.BlockSpec((V, W), lambda i: (0, 0)),  # A: constant
                                                             # index -> DMA'd
                                                             # once, resident
                ],
                out_specs=pl.BlockSpec((tm, W), lambda i: (i, 0)),
            ),
            compiler_params=pltpu.CompilerParams(
                # "parallel" lets the grid shard across both v7x TensorCores.
                dimension_semantics=("parallel",),
                vmem_limit_bytes=vmem_limit,
                # Allow XLA to fuse the transpose(+cast) producer into the x
                # operand of the custom call; A is a raw parameter.
                allow_input_fusion=[True, False],
            ),
            cost_estimate=cost,
        )(xt, a_in)

    out_flat = None
    if input_buffers != 2:
        # Deeper input pipelining (v5e: hide the longer per-step HBM DMA).
        try:
            out_flat = _call(
                pl.BlockSpec((tm, V), lambda i: (i, 0),
                             pipeline_mode=pl.Buffered(input_buffers)))
        except Exception:
            out_flat = None  # fall back to default double buffering
    if out_flat is None:
        out_flat = _call(pl.BlockSpec((tm, V), lambda i: (i, 0)))

    out_nclw = out_flat.reshape(N, C, L, W)
    if out_layout == "nclw":
        return out_nclw
    # (M, W) -> (N, C, L, W) -> (N, C, W, L): the module's NCWL layout
    # (layout plumbing in the wrapper, not per-grid-step compute).
    return jnp.transpose(out_nclw, (0, 1, 3, 2))


if __name__ == "__main__":
    key = jax.random.PRNGKey(0)
    kx, ka = jax.random.split(key)

    # Small shapes consistent with the module's forward: x is (N, C, V, L),
    # A is the (V, W) adjacency (square, as in the traffic-graph setting).
    N, C, V, L = 2, 4, 16, 8
    W = V
    x = jax.random.normal(kx, (N, C, V, L), dtype=jnp.float32)
    A = jax.random.normal(ka, (V, W), dtype=jnp.float32)

    ref = jnp.einsum("ncvl,vw->ncwl", x, A)

    # 1) Exact-precision path (default): same numerics as the torch einsum.
    out = jax.block_until_ready(nconv(x, A))
    assert out.shape == (N, C, W, L)
    assert jnp.allclose(out, ref, atol=1e-4, rtol=1e-4)

    # 2) bf16-input fast path (f32 accumulation): looser tolerance by design.
    out_bf16 = jax.block_until_ready(nconv(x, A, compute_dtype=jnp.bfloat16))
    assert out_bf16.shape == (N, C, W, L)
    assert jnp.allclose(out_bf16, ref, atol=3e-1, rtol=5e-2)

    # 3) Transpose-free consumer layout (review item #1 fallback).
    out_nclw = jax.block_until_ready(nconv(x, A, out_layout="nclw"))
    assert out_nclw.shape == (N, C, L, W)
    assert jnp.allclose(jnp.transpose(out_nclw, (0, 1, 3, 2)), ref,
                        atol=1e-4, rtol=1e-4)

    print("KERNEL_OK")
</pallas_src>

<mosaic_0001>
module attributes {stable_mosaic.version = 11 : i64} {
  func.func @_nconv_matmul_kernel(%arg0: i32, %arg1: memref<64x16xf32, #tpu.memory_space<vmem>>, %arg2: memref<16x16xf32, #tpu.memory_space<vmem>>, %arg3: memref<64x16xf32, #tpu.memory_space<vmem>>) attributes {dimension_semantics = [#tpu.dimension_semantics<parallel>], iteration_bounds = array<i64: 1>, scalar_prefetch = 0 : i64, scratch_operands = 0 : i64, tpu.core_type = #tpu.core_type<tc>, window_params = [{transform_indices = @transform_0, window_bounds = array<i64: 64, 16>}, {pipeline_mode = #tpu.pipeline_mode<synchronous>, transform_indices = @transform_1, window_bounds = array<i64: 16, 16>}, {transform_indices = @transform_2, window_bounds = array<i64: 64, 16>}]} {
    %c0 = arith.constant 0 : index
    %c0_0 = arith.constant 0 : index
    %0 = vector.load %arg1[%c0, %c0_0] : memref<64x16xf32, #tpu.memory_space<vmem>>, vector<64x16xf32>
    %c0_1 = arith.constant 0 : index
    %c0_2 = arith.constant 0 : index
    %1 = vector.load %arg2[%c0_1, %c0_2] : memref<16x16xf32, #tpu.memory_space<vmem>>, vector<16x16xf32>
    %cst = arith.constant dense<0.000000e+00> : vector<64x16xf32>
    %2 = tpu.matmul %0, %1, %cst {dimension_numbers = #tpu.dot_dimension_numbers<[1], [0], [0], [1], [0, 0, 1, 1], [], []>} : vector<64x16xf32>, vector<16x16xf32>, vector<64x16xf32> -> vector<64x16xf32>
    %c0_3 = arith.constant 0 : index
    %c0_4 = arith.constant 0 : index
    %3 = vector.load %arg3[%c0_3, %c0_4] : memref<64x16xf32, #tpu.memory_space<vmem>>, vector<64x16xf32>
    tpu.vector_store %arg3[%c0_3, %c0_4], %2 {strides = array<i32>} : memref<64x16xf32, #tpu.memory_space<vmem>>, vector<64x16xf32>,
    return
  }
  func.func @transform_0(%arg0: i32) -> (i32, i32) {
    %c0_i32 = arith.constant 0 : i32
    %c0_i32_0 = arith.constant 0 : i32
    return %arg0, %c0_i32 : i32, i32
  }
  func.func @transform_1(%arg0: i32) -> (i32, i32) {
    %c0_i32 = arith.constant 0 : i32
    %c0_i32_0 = arith.constant 0 : i32
    %c0_i32_1 = arith.constant 0 : i32
    return %c0_i32, %c0_i32_0 : i32, i32
  }
  func.func @transform_2(%arg0: i32) -> (i32, i32) {
    %c0_i32 = arith.constant 0 : i32
    %c0_i32_0 = arith.constant 0 : i32
    return %arg0, %c0_i32 : i32, i32
  }
}

</mosaic_0001>

<llo_original>
// kernel: tpu_custom_call.1
$region0: #{tpu_custom_call.1}
  #allocation0 [shape = 'u32[]', space=smem, size = 0x4, offset = 0x4, fixed_abs, tag = 'smem constant byte address 0x4 - core index']
  #allocation1 [shape = 'u32[144,128]{1,0:T(1,128)}', space=vmem, size = 0x12000, scoped, tag = 'internal scratch']
  %s0 = inlined_call_operand.vmem [shape: f32[64,16], index: 0, kind: input, shape index: {}]
  %s1 = inlined_call_operand.vmem [shape: f32[16,16], index: 1, kind: input, shape index: {}]
  %s2 = inlined_call_operand.vmem [shape: f32[64,16], index: 2, kind: output, shape index: {}]
  %s3 = sld [smem:[#allocation0]]
  $region18: #{tpu_custom_call.1} parent=0
    _
  %s5 = ssub.s32 1, %s3
  %s6 = scalar_select 0, %s5, %s3
  // Predicated region
  $region2: #{tpu_custom_call.1} parent=0 // pred_check
    _
  $region3: #{tpu_custom_call.1} parent=0 // pred_check_branch
    %8 = sbr.rel (0) target = $region5
  $region4: #{tpu_custom_call.1} parent=0 // pred_region
    _
  $region5: #{tpu_custom_call.1} parent=0 // pred_fallthru
    _
  // Predicated region
  $region6: #{tpu_custom_call.1} parent=0 // pred_check
    _
  $region7: #{tpu_custom_call.1} parent=0 // pred_check_branch
    %10 = sbr.rel (0) target = $region9
  $region8: #{tpu_custom_call.1} parent=0 // pred_region
    _
  $region9: #{tpu_custom_call.1} parent=0 // pred_fallthru
    _
  %v11 = vld [vmem:[%s0] sm:$0xff]
  %v12 = vld [vmem:[%s0 + $0x8] sm:$0xff]
  %v13 = vld [vmem:[%s0 + $0x10] sm:$0xff]
  %v14 = vld [vmem:[%s0 + $0x18] sm:$0xff]
  %v15 = vld [vmem:[%s0 + $0x20] sm:$0xff]
  %v16 = vld [vmem:[%s0 + $0x28] sm:$0xff]
  %v17 = vld [vmem:[%s0 + $0x30] sm:$0xff]
  %v18 = vld [vmem:[%s0 + $0x38] sm:$0xff]
  %v19 = vld [vmem:[%s1] sm:$0xff]
  %v20 = vld [vmem:[%s1 + $0x8] sm:$0xff]
  %vm21 = vcmask 130048
  %v23 = vsel %vm21, %v11, 0
  %v26 = vsel %vm21, %v12, 0
  %v29 = vsel %vm21, %v13, 0
  %v32 = vsel %vm21, %v14, 0
  %v35 = vsel %vm21, %v15, 0
  %v38 = vsel %vm21, %v16, 0
  %v41 = vsel %vm21, %v17, 0
  %v44 = vsel %vm21, %v18, 0
  %46 = vmatprep.subr.mxu0 0.0
  %47 = vmatpush1.msra.mxu0 0.0
  %48 = vmatprep.subr.mxu0 0.0
  %49 = vmatpush1.msra.mxu0 0.0
  %50 = vmatprep.subr.mxu0 0.0
  %51 = vmatpush1.msra.mxu0 0.0
  %52 = vmatprep.subr.mxu0 0.0
  %53 = vmatpush1.msra.mxu0 0.0
  %54 = vmatprep.subr.mxu0 0.0
  %55 = vmatpush1.msra.mxu0 0.0
  %56 = vmatprep.subr.mxu0 0.0
  %57 = vmatpush1.msra.mxu0 0.0
  %58 = vmatprep.subr.mxu0 0.0
  %59 = vmatpush1.msra.mxu0 0.0
  %60 = vmatprep.subr.mxu0 0.0
  %61 = vmatpush1.msra.mxu0 0.0
  %62 = vmatprep.subr.mxu0 0.0
  %63 = vmatpush1.msra.mxu0 0.0
  %64 = vmatprep.subr.mxu0 0.0
  %65 = vmatpush1.msra.mxu0 0.0
  %66 = vmatprep.subr.mxu0 0.0
  %67 = vmatpush1.msra.mxu0 0.0
  %68 = vmatprep.subr.mxu0 0.0
  %69 = vmatpush1.msra.mxu0 0.0
  %70 = vmatprep.subr.mxu0 0.0
  %71 = vmatpush1.msra.mxu0 0.0
  %72 = vmatprep.subr.mxu0 0.0
  %73 = vmatpush1.msra.mxu0 0.0
  %74 = vmatprep.subr.mxu0 0.0
  %75 = vmatpush1.msra.mxu0 %v20
  %76 = vmatprep.subr.mxu0 0.0
  %77 = vmatpush1.msra.mxu0 %v19
  %78 = vmatprep.subr.mxu0 0.0
  %79 = vmatpush2.msra.mxu0 0.0
  %80 = vmatprep.subr.mxu0 0.0
  %81 = vmatpush2.msra.mxu0 0.0
  %82 = vmatprep.subr.mxu0 0.0
  %83 = vmatpush2.msra.mxu0 0.0
  %84 = vmatprep.subr.mxu0 0.0
  %85 = vmatpush2.msra.mxu0 0.0
  %86 = vmatprep.subr.mxu0 0.0
  %87 = vmatpush2.msra.mxu0 0.0
  %88 = vmatprep.subr.mxu0 0.0
  %89 = vmatpush2.msra.mxu0 0.0
  %90 = vmatprep.subr.mxu0 0.0
  %91 = vmatpush2.msra.mxu0 0.0
  %92 = vmatprep.subr.mxu0 0.0
  %93 = vmatpush2.msra.mxu0 0.0
  %94 = vmatprep.subr.mxu0 0.0
  %95 = vmatpush2.msra.mxu0 0.0
  %96 = vmatprep.subr.mxu0 0.0
  %97 = vmatpush2.msra.mxu0 0.0
  %98 = vmatprep.subr.mxu0 0.0
  %99 = vmatpush2.msra.mxu0 0.0
  %100 = vmatprep.subr.mxu0 0.0
  %101 = vmatpush2.msra.mxu0 0.0
  %102 = vmatprep.subr.mxu0 0.0
  %103 = vmatpush2.msra.mxu0 0.0
  %104 = vmatprep.subr.mxu0 0.0
  %105 = vmatpush2.msra.mxu0 0.0
  %106 = vmatprep.subr.mxu0 0.0
  %107 = vmatpush2.msra.mxu0 0.0
  %108 = vmatprep.subr.mxu0 0.0
  %109 = vmatpush2.msra.mxu0 0.0
  %110 = vmatprep.mubr.f32.mxu0 0.0
  %111 = vmatmul.mubr.f32.gmra.mxu0 %v23
  %v112 = vpop.f32.mrf.mxu0
  %v113 = vadd.f32 0.0, %v112
  %v114 = vpop.f32.mrf.mxu0
  %115 = vmatprep.mubr.f32.mxu0 0.0
  %116 = vmatmul.mubr.f32.gmra.mxu0 %v26
  %v117 = vpop.f32.mrf.mxu0
  %v118 = vadd.f32 0.0, %v117
  %v119 = vpop.f32.mrf.mxu0
  %120 = vmatprep.mubr.f32.mxu0 0.0
  %121 = vmatmul.mubr.f32.gmra.mxu0 %v29
  %v122 = vpop.f32.mrf.mxu0
  %v123 = vadd.f32 0.0, %v122
  %v124 = vpop.f32.mrf.mxu0
  %125 = vmatprep.mubr.f32.mxu0 0.0
  %126 = vmatmul.mubr.f32.gmra.mxu0 %v32
  %v127 = vpop.f32.mrf.mxu0
  %v128 = vadd.f32 0.0, %v127
  %v129 = vpop.f32.mrf.mxu0
  %130 = vmatprep.mubr.f32.mxu0 0.0
  %131 = vmatmul.mubr.f32.gmra.mxu0 %v35
  %v132 = vpop.f32.mrf.mxu0
  %v133 = vadd.f32 0.0, %v132
  %v134 = vpop.f32.mrf.mxu0
  %135 = vmatprep.mubr.f32.mxu0 0.0
  %136 = vmatmul.mubr.f32.gmra.mxu0 %v38
  %v137 = vpop.f32.mrf.mxu0
  %v138 = vadd.f32 0.0, %v137
  %v139 = vpop.f32.mrf.mxu0
  %140 = vmatprep.mubr.f32.mxu0 0.0
  %141 = vmatmul.mubr.f32.gmra.mxu0 %v41
  %v142 = vpop.f32.mrf.mxu0
  %v143 = vadd.f32 0.0, %v142
  %v144 = vpop.f32.mrf.mxu0
  %145 = vmatprep.mubr.f32.mxu0 0.0
  %146 = vmatmul.mubr.f32.gmra.mxu0 %v44
  %v147 = vpop.f32.mrf.mxu0
  %v148 = vadd.f32 0.0, %v147
  %v149 = vpop.f32.mrf.mxu0
  %150 = vdwg.mxu0
  %151 = vst.msk [vmem:[%s2] sm:$0xff] %vm21, %v113
  %152 = vst.msk [vmem:[%s2 + $0x8] sm:$0xff] %vm21, %v118
  %153 = vst.msk [vmem:[%s2 + $0x10] sm:$0xff] %vm21, %v123
  %154 = vst.msk [vmem:[%s2 + $0x18] sm:$0xff] %vm21, %v128
  %155 = vst.msk [vmem:[%s2 + $0x20] sm:$0xff] %vm21, %v133
  %156 = vst.msk [vmem:[%s2 + $0x28] sm:$0xff] %vm21, %v138
  %157 = vst.msk [vmem:[%s2 + $0x30] sm:$0xff] %vm21, %v143
  %158 = vst.msk [vmem:[%s2 + $0x38] sm:$0xff] %vm21, %v148
  // Predicated region
  $region10: #{tpu_custom_call.1} parent=0 // pred_check
    _
  $region11: #{tpu_custom_call.1} parent=0 // pred_check_branch
    %160 = sbr.rel (0) target = $region13
  $region12: #{tpu_custom_call.1} parent=0 // pred_region
    _
  $region13: #{tpu_custom_call.1} parent=0 // pred_fallthru
    _
  // Predicated region
  $region14: #{tpu_custom_call.1} parent=0 // pred_check
    _
  $region15: #{tpu_custom_call.1} parent=0 // pred_check_branch
    %162 = sbr.rel (0) target = $region17
  $region16: #{tpu_custom_call.1} parent=0 // pred_region
    _
  $region17: #{tpu_custom_call.1} parent=0 // pred_fallthru
    _

</llo_original>
